<compile_context>
chip_gen: v7x
topology: tpu7x:2x2x1
jax: 0.10.0
libtpu: 0.0.40
codegen_flags: <defaults>
</compile_context>

<pallas_src>
import numpy as np
import jax
import jax.numpy as jnp
from jax.experimental import pallas as pl
from jax.experimental.pallas import tpu as pltpu


# ---------------------------------------------------------------------------
# Host-side grid generation (direct numpy port of the PyTorch module).
# ---------------------------------------------------------------------------
def get_xy(delta_phi, delta_theta):
    t_t, t_p, c_t = np.tan(delta_theta), np.tan(delta_phi), np.cos(delta_theta)
    return np.array([
        [(-t_t, 1 / c_t * t_p), (0, t_p), (t_t, 1 / c_t * t_p)],
        [(-t_t, 0), (1, 1), (t_t, 0)],
        [(-t_t, -1 / c_t * t_p), (0, -t_p), (t_t, -1 / c_t * t_p)],
    ])


def cal_index(h, w, img_r, img_c):
    pi = np.pi
    phi = -((img_r + 0.5) / h * pi - pi / 2)
    theta = (img_c + 0.5) / w * 2 * pi - pi
    delta_phi = pi / h
    delta_theta = 2 * pi / w
    xys = get_xy(delta_phi, delta_theta)
    x = xys[..., 0]
    y = xys[..., 1]
    with np.errstate(invalid="ignore", divide="ignore"):
        rho = np.sqrt(x ** 2 + y ** 2)
        v = np.arctan(rho)
        new_phi = np.arcsin(np.cos(v) * np.sin(phi)
                            + y * np.sin(v) * np.cos(phi) / rho)
        new_theta = theta + np.arctan(
            x * np.sin(v)
            / (rho * np.cos(phi) * np.cos(v) - y * np.sin(phi) * np.sin(v)))
    new_r = (-new_phi + pi / 2) * h / pi - 0.5
    new_c = (new_theta + pi) * w / (2 * pi) - 0.5
    new_c = (new_c + w) % w
    out = np.stack([new_r, new_c], axis=-1)
    out[1, 1] = (img_r, img_c)
    return out


def gen_filters_coordinates(h, w, stride=1):
    h, w = int(h), int(w)
    co = np.array([[cal_index(h, w, i, j) for j in range(0, w, stride)]
                   for i in range(0, h, stride)])
    return np.ascontiguousarray(co.transpose([4, 0, 1, 2, 3]))  # (2,Ho,Wo,3,3)


def build_sampling_matrices_T(h, w, stride=1):
    """Dense bilinear sampling matrices S: (9, H*W, P).

    S[k, q, p] = bilinear weight of source pixel q for output pixel p at tap k
    (k = ki*3 + kj). Reproduces F.grid_sample(mode='bilinear',
    align_corners=False, padding_mode='zeros') on gen_grid_coordinates' grid
    (normalization + align_corners=False unnormalization collapse to sampling
    at pixel coordinates (r-0.5, c-0.5))."""
    co = gen_filters_coordinates(h, w, stride)      # (2, Ho, Wo, 3, 3)
    r, c = co[0], co[1]
    ho, wo = r.shape[0], r.shape[1]
    P = ho * wo
    rr = r.reshape(P, 9)                            # p = i*Wo + j ; k = ki*3+kj
    cc = c.reshape(P, 9)
    iy = rr - 0.5
    ix = cc - 0.5
    y0 = np.floor(iy).astype(np.int64)
    x0 = np.floor(ix).astype(np.int64)
    dy = (iy - y0).astype(np.float32)
    dx = (ix - x0).astype(np.float32)
    S = np.zeros((9, h * w, P), dtype=np.float32)
    pidx = np.arange(P)
    for k in range(9):
        for yy, wy in ((y0[:, k], 1.0 - dy[:, k]), (y0[:, k] + 1, dy[:, k])):
            for xx, wx in ((x0[:, k], 1.0 - dx[:, k]), (x0[:, k] + 1, dx[:, k])):
                valid = (yy >= 0) & (yy < h) & (xx >= 0) & (xx < w)
                src = (yy * w + xx)[valid]
                np.add.at(S[k], (src, pidx[valid]), (wy * wx)[valid])
    return S, ho, wo


# ---------------------------------------------------------------------------
# Pallas kernel: grid = (p_tiles, 9 taps, q_tiles); (k, qt) are the reduction.
#   s_ref: (tile_q, tile_p) bf16   contiguous pre-tiled sampling block
#   z_ref: (N*O, tile_q)    bf16   weight-folded LHS block
#   b_ref: (N*O, 1)         f32    bias (folded into accumulator init)
#   o_ref: (N*O, tile_p)    f32    resident accumulator across (k, qt)
# ---------------------------------------------------------------------------
def _sphere_conv_kernel(s_ref, z_ref, b_ref, o_ref):
    k = pl.program_id(1)
    qt = pl.program_id(2)

    @pl.when(jnp.logical_and(k == 0, qt == 0))
    def _init():
        # Bias folded into the accumulator init (no epilogue add).
        o_ref[...] = jnp.broadcast_to(b_ref[...], o_ref.shape)

    o_ref[...] += jnp.dot(z_ref[...], s_ref[...],
                          preferred_element_type=jnp.float32)


# ---------------------------------------------------------------------------
# VMEM-aware tile selection.
# ---------------------------------------------------------------------------
def _tpu_vmem_capacity_bytes():
    try:
        cap = getattr(pltpu.get_tpu_info(), "vmem_capacity_bytes", None)
        if cap:
            return int(cap)
    except Exception:
        pass
    return 64 * 1024 * 1024   # conservative default (v7x per-TC VMEM)


def _tile_candidates(dim):
    cands = [t for t in range(128, dim + 1, 128) if dim % t == 0]
    return cands if cands else [dim]        # fall back to full extent


def _choose_tiles(hw, p, no, budget_bytes):
    """Largest (tile_q, tile_p) fitting the VMEM budget; prefer >=2 P tiles so
    the leading 'parallel' axis feeds both v7x TensorCores."""
    p_cands = _tile_candidates(p)
    multi = [t for t in p_cands if p // t >= 2]
    if multi:
        p_cands = multi
    q_cands = _tile_candidates(hw)

    def need(tq, tp):
        return (2 * tq * tp * 2        # S block, bf16, double-buffered
                + 2 * no * tq * 2      # Z block, bf16, double-buffered
                + 2 * no * 4           # bias
                + 2 * no * tp * 4)     # output block, f32

    best = None
    for tp in p_cands:
        for tq in q_cands:
            nb = need(tq, tp)
            if nb > budget_bytes:
                continue
            key = (tq * tp, tp, tq)
            if best is None or key > best[0]:
                best = (key, tq, tp, nb)
    if best is None:
        tq, tp = min(q_cands), min(p_cands)
        return tq, tp, need(tq, tp)
    return best[1], best[2], best[3]


# ---------------------------------------------------------------------------
# Input-independent precompute (the PyTorch module caches self.grid):
# sampling matrices, tile choice, pre-tiled bf16 S cached on device ONCE.
# ---------------------------------------------------------------------------
def prepare_sphere_conv(h, w, stride, batch, out_c):
    S, ho, wo = build_sampling_matrices_T(h, w, stride)     # (9, HW, P) f32
    hw, p = S.shape[1], S.shape[2]
    no = batch * out_c

    vmem_cap = _tpu_vmem_capacity_bytes()
    budget = (vmem_cap * 2) // 5                            # ~40% for pipeline buffers
    tile_q, tile_p, need = _choose_tiles(hw, p, no, budget)
    n_qt, n_pt = hw // tile_q, p // tile_p

    # Pre-tile S in HBM so every kernel block is one contiguous DMA.
    S_tiled = np.ascontiguousarray(
        S.reshape(9, n_qt, tile_q, n_pt, tile_p).transpose(0, 3, 1, 2, 4))
    # TODO(synk): store S as int8/fp8 (or gather/block-sparse: <=4 nonzeros per
    # column) to cut the dominant HBM traffic at real SST-Sal resolutions.
    s_dev = jnp.asarray(S_tiled, dtype=jnp.bfloat16)        # cast cached once

    vmem_limit = int(min(vmem_cap * 9 // 10,
                         max(2 * need, 32 * 1024 * 1024)))

    return dict(s_tiled=s_dev, s_dense=S, ho=ho, wo=wo, hw=hw, p=p,
                tile_q=tile_q, tile_p=tile_p, n_qt=n_qt, n_pt=n_pt,
                batch=batch, out_c=out_c, vmem_limit=vmem_limit)


def sphere_conv2d(x, weight, bias, plan):
    """x: (N, C, H, W) f32 (NCHW like PyTorch) -> (N, O, Ho, Wo) f32."""
    N, C, H, W = x.shape
    O = weight.shape[0]
    assert N == plan["batch"] and O == plan["out_c"]
    HW = H * W
    assert HW == plan["hw"]
    NO = N * O
    P = plan["p"]
    tile_q, tile_p = plan["tile_q"], plan["tile_p"]
    n_qt, n_pt = plan["n_qt"], plan["n_pt"]

    # Fold the 3x3 conv weights into the LHS (single XLA einsum) so the kernel
    # is a plain tiled matmul:  out += Z[k] @ S[k].
    w9 = weight.reshape(O, C, 9).astype(jnp.float32)
    z = jnp.einsum("ock,ncq->knoq", w9,
                   x.reshape(N, C, HW).astype(jnp.float32))
    z = z.reshape(9, NO, HW).astype(jnp.bfloat16)

    if bias is None:
        bias = jnp.zeros((O,), jnp.float32)
    b = jnp.tile(bias.astype(jnp.float32), (N,)).reshape(NO, 1)

    flops = 2 * 9 * NO * HW * P
    bytes_accessed = (9 * HW * P * 2          # S streamed exactly once
                      + 9 * NO * HW * 2 * n_pt  # Z re-streamed per P tile
                      + NO * P * 4 + NO * 4)

    out = pl.pallas_call(
        _sphere_conv_kernel,
        out_shape=jax.ShapeDtypeStruct((NO, P), jnp.float32),
        grid_spec=pltpu.PrefetchScalarGridSpec(
            num_scalar_prefetch=0,
            grid=(n_pt, 9, n_qt),
            in_specs=[
                # Contiguous pre-tiled S block (tile_q, tile_p).
                pl.BlockSpec((None, None, None, tile_q, tile_p),
                             lambda pt, k, qt: (k, pt, qt, 0, 0)),
                # Weight-folded LHS block (NO, tile_q), streamed over (k, qt).
                pl.BlockSpec((None, NO, tile_q),
                             lambda pt, k, qt: (k, 0, qt)),
                # Bias (tiny, folded into the accumulator init).
                pl.BlockSpec((NO, 1), lambda pt, k, qt: (0, 0)),
            ],
            # Output ignores (k, qt): resident accumulator; last dim = tile_p
            # (multiple of 128) -> lane-dense unmasked stores.
            out_specs=pl.BlockSpec((NO, tile_p), lambda pt, k, qt: (0, pt)),
        ),
        compiler_params=pltpu.CompilerParams(
            dimension_semantics=("parallel", "arbitrary", "arbitrary"),
            vmem_limit_bytes=plan["vmem_limit"]),
        cost_estimate=pl.CostEstimate(flops=int(flops), transcendentals=0,
                                      bytes_accessed=int(bytes_accessed)),
    )(plan["s_tiled"], z, b)

    return out.reshape(N, O, plan["ho"], plan["wo"])


# ---------------------------------------------------------------------------
# Plain-JAX f32 reference (same math, no Pallas).
# ---------------------------------------------------------------------------
def reference(x, S_dense, weight, bias, ho, wo):
    N, C, H, W = x.shape
    O = weight.shape[0]
    xf = x.reshape(N, C, H * W)
    sampled = jnp.einsum("ncq,kqp->nkcp", xf, jnp.asarray(S_dense))
    w2 = weight.reshape(O, C, 9)
    out = jnp.einsum("nkcp,ock->nop", sampled, w2) + bias[None, :, None]
    return out.reshape(N, O, ho, wo)


if __name__ == "__main__":
    N, C, H, W, O = 2, 4, 16, 16, 8
    key = jax.random.PRNGKey(0)
    kx, kw, kb = jax.random.split(key, 3)

    x = jax.random.normal(kx, (N, C, H, W), dtype=jnp.float32)

    # Parameter init mirroring reset_parameters():
    # kaiming_uniform_(a=sqrt(5)) -> U(-1/sqrt(fan_in), 1/sqrt(fan_in)).
    fan_in = C * 3 * 3
    bound = 1.0 / np.sqrt(fan_in)
    weight = jax.random.uniform(kw, (O, C, 3, 3), minval=-bound, maxval=bound,
                                dtype=jnp.float32)
    # Nonzero bias (module zeroes it at init, but any trained value is legal);
    # exercises the bias-fold path.
    bias = jax.random.uniform(kb, (O,), minval=-bound, maxval=bound,
                              dtype=jnp.float32)

    plan = prepare_sphere_conv(H, W, 1, N, O)

    out = sphere_conv2d(x, weight, bias, plan)
    out = jax.block_until_ready(out)

    ref = reference(x, plan["s_dense"], weight, bias, plan["ho"], plan["wo"])
    assert out.shape == (N, O, plan["ho"], plan["wo"]), out.shape
    # bf16 MXU operands (f32 accumulation) vs. a pure-f32 reference.
    np.testing.assert_allclose(np.asarray(out), np.asarray(ref),
                               rtol=2e-2, atol=2e-2)
    print("KERNEL_OK")
</pallas_src>

<mosaic_0001>
module attributes {stable_mosaic.version = 11 : i64} {
  func.func @_sphere_conv_kernel(%arg0: i32, %arg1: i32, %arg2: i32, %arg3: memref<1x1x1x256x128xbf16, #tpu.memory_space<vmem>>, %arg4: memref<1x16x256xbf16, #tpu.memory_space<vmem>>, %arg5: memref<16x1xf32, #tpu.memory_space<vmem>>, %arg6: memref<16x128xf32, #tpu.memory_space<vmem>>) attributes {dimension_semantics = [#tpu.dimension_semantics<parallel>, #tpu.dimension_semantics<arbitrary>, #tpu.dimension_semantics<arbitrary>], iteration_bounds = array<i64: 2, 9, 1>, scalar_prefetch = 0 : i64, scratch_operands = 0 : i64, tpu.core_type = #tpu.core_type<tc>, window_params = [{transform_indices = @transform_0, window_bounds = array<i64: 1, 1, 1, 256, 128>}, {transform_indices = @transform_1, window_bounds = array<i64: 1, 16, 256>}, {pipeline_mode = #tpu.pipeline_mode<synchronous>, transform_indices = @transform_2, window_bounds = array<i64: 16, 1>}, {transform_indices = @transform_3, window_bounds = array<i64: 16, 128>}]} {
    %c0_i32 = arith.constant 0 : i32
    %0 = arith.cmpi eq, %arg1, %c0_i32 : i32
    %c0_i32_0 = arith.constant 0 : i32
    %1 = arith.cmpi eq, %arg2, %c0_i32_0 : i32
    %2 = arith.andi %0, %1 : i1
    %3 = arith.extui %2 : i1 to i32
    %c0_i32_1 = arith.constant 0 : i32
    %4 = arith.cmpi ne, %3, %c0_i32_1 : i32
    scf.if %4 {
      %c0_13 = arith.constant 0 : index
      %c0_14 = arith.constant 0 : index
      %13 = vector.load %arg5[%c0_13, %c0_14] : memref<16x1xf32, #tpu.memory_space<vmem>>, vector<16x1xf32>
      %14 = vector.shape_cast %13 : vector<16x1xf32> to vector<16x1xf32>
      %15 = vector.broadcast %14 : vector<16x1xf32> to vector<16x128xf32>
      %c0_15 = arith.constant 0 : index
      %c0_16 = arith.constant 0 : index
      %16 = vector.load %arg6[%c0_15, %c0_16] : memref<16x128xf32, #tpu.memory_space<vmem>>, vector<16x128xf32>
      tpu.vector_store %arg6[%c0_15, %c0_16], %15 {strides = array<i32>} : memref<16x128xf32, #tpu.memory_space<vmem>>, vector<16x128xf32>,
    } else {
    }
    %c0 = arith.constant 0 : index
    %c0_2 = arith.constant 0 : index
    %5 = vector.load %arg6[%c0, %c0_2] : memref<16x128xf32, #tpu.memory_space<vmem>>, vector<16x128xf32>
    %c0_3 = arith.constant 0 : index
    %c0_4 = arith.constant 0 : index
    %c0_5 = arith.constant 0 : index
    %6 = vector.load %arg4[%c0_3, %c0_4, %c0_5] : memref<1x16x256xbf16, #tpu.memory_space<vmem>>, vector<1x16x256xbf16>
    %7 = vector.shape_cast %6 : vector<1x16x256xbf16> to vector<16x256xbf16>
    %c0_6 = arith.constant 0 : index
    %c0_7 = arith.constant 0 : index
    %c0_8 = arith.constant 0 : index
    %c0_9 = arith.constant 0 : index
    %c0_10 = arith.constant 0 : index
    %8 = vector.load %arg3[%c0_6, %c0_7, %c0_8, %c0_9, %c0_10] : memref<1x1x1x256x128xbf16, #tpu.memory_space<vmem>>, vector<1x1x1x256x128xbf16>
    %9 = vector.shape_cast %8 : vector<1x1x1x256x128xbf16> to vector<256x128xbf16>
    %cst = arith.constant dense<0.000000e+00> : vector<16x128xf32>
    %10 = tpu.matmul %7, %9, %cst {dimension_numbers = #tpu.dot_dimension_numbers<[1], [0], [0], [1], [0, 0, 1, 1], [], []>} : vector<16x256xbf16>, vector<256x128xbf16>, vector<16x128xf32> -> vector<16x128xf32>
    %11 = arith.addf %5, %10 : vector<16x128xf32>
    %c0_11 = arith.constant 0 : index
    %c0_12 = arith.constant 0 : index
    %12 = vector.load %arg6[%c0_11, %c0_12] : memref<16x128xf32, #tpu.memory_space<vmem>>, vector<16x128xf32>
    tpu.vector_store %arg6[%c0_11, %c0_12], %11 {strides = array<i32>} : memref<16x128xf32, #tpu.memory_space<vmem>>, vector<16x128xf32>,
    return
  }
  func.func @transform_0(%arg0: i32, %arg1: i32, %arg2: i32) -> (i32, i32, i32, i32, i32) {
    %c0_i32 = arith.constant 0 : i32
    %c0_i32_0 = arith.constant 0 : i32
    %c0_i32_1 = arith.constant 0 : i32
    return %arg1, %arg0, %arg2, %c0_i32, %c0_i32_0 : i32, i32, i32, i32, i32
  }
  func.func @transform_1(%arg0: i32, %arg1: i32, %arg2: i32) -> (i32, i32, i32) {
    %c0_i32 = arith.constant 0 : i32
    %c0_i32_0 = arith.constant 0 : i32
    return %arg1, %c0_i32, %arg2 : i32, i32, i32
  }
  func.func @transform_2(%arg0: i32, %arg1: i32, %arg2: i32) -> (i32, i32) {
    %c0_i32 = arith.constant 0 : i32
    %c0_i32_0 = arith.constant 0 : i32
    %c0_i32_1 = arith.constant 0 : i32
    return %c0_i32, %c0_i32_0 : i32, i32
  }
  func.func @transform_3(%arg0: i32, %arg1: i32, %arg2: i32) -> (i32, i32) {
    %c0_i32 = arith.constant 0 : i32
    %c0_i32_0 = arith.constant 0 : i32
    return %c0_i32, %arg0 : i32, i32
  }
}

</mosaic_0001>

<llo_original>
// kernel: tpu_custom_call.1
$region0: #{tpu_custom_call.1}
  #allocation0 [shape = 'u32[]', space=smem, size = 0x4, offset = 0x4, fixed_abs, tag = 'smem constant byte address 0x4 - core index']
  #allocation1 [shape = 'u32[144,128]{1,0:T(1,128)}', space=vmem, size = 0x12000, scoped, tag = 'internal scratch']
  %s0 = inlined_call_operand.hbm [shape: bf16[9,2,1,256,128], index: 0, kind: input, shape index: {}]
  %s1 = inlined_call_operand.hbm [shape: bf16[9,16,256], index: 1, kind: input, shape index: {}]
  %s2 = inlined_call_operand.vmem [shape: f32[16,1], index: 2, kind: input, shape index: {}]
  %s3 = inlined_call_operand.hbm [shape: f32[16,256], index: 3, kind: output, shape index: {}]
  %s4 = sld [smem:[#allocation0]]
  $region57: #{tpu_custom_call.1} parent=0
    _
  %s6 = ssub.s32 1, %s4
  %s7 = scalar_select 0, %s6, %s4
  $region1: #{tpu_custom_call.1} parent=0
    #allocation2 [shape = 'u8[131072]{0}', space=vmem, size = 0x20000, scoped, tag = 'input window, operand 0']
    #allocation3 [shape = 's32[2]{0}', space=sflag, size = 0x8, scoped, tag = 'scoped memory for tpu_custom_call.1']
    #allocation4 [shape = 's32[2]{0}', space=sflag, size = 0x8, scoped, tag = 'scoped memory for tpu_custom_call.1']
    #allocation5 [shape = 'u8[16384]{0}', space=vmem, size = 0x4000, scoped, tag = 'input window, operand 1']
    #allocation6 [shape = 's32[2]{0}', space=sflag, size = 0x8, scoped, tag = 'scoped memory for tpu_custom_call.1']
    #allocation7 [shape = 'u8[16384]{0}', space=vmem, size = 0x4000, scoped, tag = 'output window, operand 0']
    %8 = vsyncpa [#allocation3], 0
    %s9 = scalar_lea.sflag [#allocation3], 1
    %10 = vsyncpa %s9, 0
    %11 = vsyncpa [#allocation6], 0
    %s12 = scalar_lea.sflag [#allocation6], 1
    %13 = vsyncpa %s12, 0
    %14 = vsyncpa [#allocation4], 0
    %s15 = scalar_lea.sflag [#allocation4], 1
    %16 = vsyncpa %s15, 0
    loop: start=0, step=1, limit=20
    $region2: #{tpu_custom_call.1} parent=1 // loop_pre_header
      _
    $region3: #{tpu_custom_call.1} parent=1 // loop_header
      %s18 = sphi 0, %s22
      %p19 = scmp.ge.s32.totalorder %s18, 20
      %s25 = sphi 0, %s44
      %s26 = sphi 0, %s40
      %s27 = sphi 0, %s36
      %s28 = sphi 0, %s25
      %s29 = sphi 0, %s26
      %s30 = sphi 0, %s27
      %s31 = sphi 0, %s28
      %s32 = sphi 0, %s29
      %s33 = sphi 0, %s30
      %s51 = sphi 0, %s53
      %s54 = sphi 0, %s51
      %s55 = sphi 0, %s54
      %s71 = sphi 0, %s55
      %s79 = sphi 0, %s81
      %s82 = sphi 0, %s79
      %s83 = sphi 0, %s82
      %s99 = sphi 0, %s83
      %s103 = sphi 0, %s103
      %s105 = sphi 0, %s103
      %s106 = sphi 0, %s105
      %s120 = sphi 0, %s106
      %s126 = sphi 0, %s128
      %s129 = sphi 0, %s126
      %s130 = sphi 0, %s129
      %s146 = sphi 0, %s130
    $region4: #{tpu_custom_call.1} parent=1 // loop_header_branch
      %21 = sbr.rel (%p19) target = $region8
    $region5: #{tpu_custom_call.1} parent=1 // loop_body
      %s23 = ssub.s32 %s18, 1
      %s24 = ssub.s32 %s18, 2
      %s34 = sadd.s32 1, %s27
      %p35 = scmp.ge.s32.totalorder %s34, 1
      %s36 = scalar_select %p35, 0, %s34
      %s37 = sadd.s32 1, %s26
      %s38 = scalar_select %p35, %s37, %s26
      %p39 = scmp.ge.s32.totalorder %s38, 9
      %s40 = scalar_select %p39, 0, %s38
      %s41 = sadd.s32 1, %s25
      %s42 = scalar_select %p39, %s41, %s25
      %p43 = scmp.ge.s32.totalorder %s42, 2
      %s44 = scalar_select %p43, 0, %s42
      %s45 = ssub.s32 %s26, %s40
      %s46 = ssub.s32 %s25, %s44
      %s47 = sor.u32 %s45, %s46
      %s48 = ssub.s32 %s27, %s36
      %s49 = sor.u32 %s47, %s48
      %p50 = scmp.eq.s32.totalorder %s49, 0
      %s52 = sadd.s32 %s51, 1
      %s53 = scalar_select %p50, %s51, %s52
      %p56 = pneg %p50
      %p57 = scmp.eq.s32.totalorder %s18, 17
      %p58 = por %p56, %p57
      %p59 = scmp.ne.s32.totalorder %s51, %s54
      %p60 = scmp.eq.s32.totalorder %s18, 0
      %p61 = por %p59, %p60
      %p62 = scmp.ne.s32.totalorder %s51, %s54
      %p63 = scmp.eq.s32.totalorder %s23, 17
      %p64 = por %p62, %p63
      %p65 = scmp.ne.s32.totalorder %s54, %s55
      %p66 = scmp.eq.s32.totalorder %s23, 0
      %p67 = por %p65, %p66
      %p68 = scmp.ne.s32.totalorder %s54, %s55
      %p69 = scmp.eq.s32.totalorder %s24, 17
      %p70 = por %p68, %p69
      %p72 = scmp.ne.s32.totalorder %s55, %s71
      %p73 = scmp.eq.s32.totalorder %s24, 0
      %p74 = por %p72, %p73
      %s75 = ssub.s32 %s26, %s40
      %s76 = ssub.s32 %s27, %s36
      %s77 = sor.u32 %s75, %s76
      %p78 = scmp.eq.s32.totalorder %s77, 0
      %s80 = sadd.s32 %s79, 1
      %s81 = scalar_select %p78, %s79, %s80
      %p84 = pneg %p78
      %p85 = scmp.eq.s32.totalorder %s18, 17
      %p86 = por %p84, %p85
      %p87 = scmp.ne.s32.totalorder %s79, %s82
      %p88 = scmp.eq.s32.totalorder %s18, 0
      %p89 = por %p87, %p88
      %p90 = scmp.ne.s32.totalorder %s79, %s82
      %p91 = scmp.eq.s32.totalorder %s23, 17
      %p92 = por %p90, %p91
      %p93 = scmp.ne.s32.totalorder %s82, %s83
      %p94 = scmp.eq.s32.totalorder %s23, 0
      %p95 = por %p93, %p94
      %p96 = scmp.ne.s32.totalorder %s82, %s83
      %p97 = scmp.eq.s32.totalorder %s24, 17
      %p98 = por %p96, %p97
      %p100 = scmp.ne.s32.totalorder %s83, %s99
      %p101 = scmp.eq.s32.totalorder %s24, 0
      %p102 = por %p100, %p101
      %s104 = sadd.s32 %s103, 1
      %p107 = scmp.eq.s32.totalorder %s18, 17
      %p108 = scmp.ne.s32.totalorder %s103, %s105
      %p109 = scmp.eq.s32.totalorder %s18, 0
      %p110 = por %p108, %p109
      %p111 = scmp.ne.s32.totalorder %s103, %s105
      %p112 = scmp.eq.s32.totalorder %s23, 17
      %p113 = por %p111, %p112
      %p114 = scmp.ne.s32.totalorder %s105, %s106
      %p115 = scmp.eq.s32.totalorder %s23, 0
      %p116 = por %p114, %p115
      %p117 = scmp.ne.s32.totalorder %s105, %s106
      %p118 = scmp.eq.s32.totalorder %s24, 17
      %p119 = por %p117, %p118
      %p121 = scmp.ne.s32.totalorder %s106, %s120
      %p122 = scmp.eq.s32.totalorder %s24, 0
      %p123 = por %p121, %p122
      %s124 = ssub.s32 %s25, %s44
      %p125 = scmp.eq.s32.totalorder %s124, 0
      %s127 = sadd.s32 %s126, 1
      %s128 = scalar_select %p125, %s126, %s127
      %p131 = pneg %p125
      %p132 = scmp.eq.s32.totalorder %s18, 17
      %p133 = por %p131, %p132
      %p134 = scmp.ne.s32.totalorder %s126, %s129
      %p135 = scmp.eq.s32.totalorder %s18, 0
      %p136 = por %p134, %p135
      %p137 = scmp.ne.s32.totalorder %s126, %s129
      %p138 = scmp.eq.s32.totalorder %s23, 17
      %p139 = por %p137, %p138
      %p140 = scmp.ne.s32.totalorder %s129, %s130
      %p141 = scmp.eq.s32.totalorder %s23, 0
      %p142 = por %p140, %p141
      %p143 = scmp.ne.s32.totalorder %s129, %s130
      %p144 = scmp.eq.s32.totalorder %s24, 17
      %p145 = por %p143, %p144
      %p147 = scmp.ne.s32.totalorder %s130, %s146
      %p148 = scmp.eq.s32.totalorder %s24, 0
      %p149 = por %p147, %p148
      %p150 = scmp.le.s32.totalorder 1, %s18
      %p151 = scmp.lt.s32.totalorder %s18, 19
      %p152 = pnand %p150, %p151
      %p153 = pneg %p152
      // Predicated region
      $region9: #{tpu_custom_call.1} parent=5 // pred_check
        _
      $region10: #{tpu_custom_call.1} parent=5 // pred_check_branch
        %155 = sbr.rel (%p152) target = $region12
      $region11: #{tpu_custom_call.1} parent=5 // pred_region
        %s156 = ssub.s32 %s18, 1
        // Predicated region
        $region13: #{tpu_custom_call.1} parent=11 // pred_check
          %p157 = pneg %p116
        $region14: #{tpu_custom_call.1} parent=11 // pred_check_branch
          %159 = sbr.rel (%p157) target = $region16
        $region15: #{tpu_custom_call.1} parent=11 // pred_region
          _
        $region16: #{tpu_custom_call.1} parent=11 // pred_fallthru
          _
      $region12: #{tpu_custom_call.1} parent=5 // pred_fallthru
        _
      %p160 = scmp.lt.s32.totalorder %s18, 18
      // Predicated region
      $region17: #{tpu_custom_call.1} parent=5 // pred_check
        %p161 = pneg %p160
      $region18: #{tpu_custom_call.1} parent=5 // pred_check_branch
        %163 = sbr.rel (%p161) target = $region20
      $region19: #{tpu_custom_call.1} parent=5 // pred_region
        // Predicated region
        $region21: #{tpu_custom_call.1} parent=19 // pred_check
          %p164 = pneg %p61
        $region22: #{tpu_custom_call.1} parent=19 // pred_check_branch
          %166 = sbr.rel (%p164) target = $region24
        $region23: #{tpu_custom_call.1} parent=19 // pred_region
          %s167 = sand.u32 %s51, 1
          %s168 = scalar_lea.sflag [#allocation3], %s167
          %s169 = sand.u32 %s51, 1
          %s170 = smul.addr %s169, 128
          %s171 = scalar_lea.vmem [#allocation2], %s170
          %s173 = ssub.s32 2048, 2048
          %174 = vsyncadd %s168, %s173
          %s175 = smul.addr %s27, 32
          %s176 = smul.addr %s25, 32
          %s177 = sadd.s32 %s175, %s176
          %s178 = smul.addr %s26, 64
          %s179 = sadd.s32 %s177, %s178
          %s180 = smul.addr %s179, 64
          %s181 = scalar_lea.hbm %s0, %s180
          %s182 = sshll.u32 %s171, 4
          %s183 = int_to_ptr.vmem [resolvable:$true] %s182
          %188 = dma.hbm_to_vmem [thread:$0]  %s181, 2048, %s183, %s168, 64, 64, 4
        $region24: #{tpu_custom_call.1} parent=19 // pred_fallthru
          _
        // Predicated region
        $region25: #{tpu_custom_call.1} parent=19 // pred_check
          %p189 = pneg %p89
        $region26: #{tpu_custom_call.1} parent=19 // pred_check_branch
          %191 = sbr.rel (%p189) target = $region28
        $region27: #{tpu_custom_call.1} parent=19 // pred_region
          %s192 = sand.u32 %s79, 1
          %s193 = scalar_lea.sflag [#allocation6], %s192
          %s194 = sand.u32 %s79, 1
          %s195 = smul.addr %s194, 16
          %s196 = scalar_lea.vmem [#allocation5], %s195
          %s197 = smul.u32 2, %s27
          %s199 = ssub.s32 256, 256
          %200 = vsyncadd %s193, %s199
          %s201 = smul.addr %s26, 4
          %s202 = sadd.s32 %s197, %s201
          %s203 = smul.addr %s202, 64
          %s204 = scalar_lea.hbm %s1, %s203
          %s205 = sshll.u32 %s196, 4
          %s206 = int_to_ptr.vmem [resolvable:$true] %s205
          %211 = dma.hbm_to_vmem [thread:$0]  %s204, 256, %s206, %s193, 128, 128, 8
        $region28: #{tpu_custom_call.1} parent=19 // pred_fallthru
          _
      $region20: #{tpu_custom_call.1} parent=5 // pred_fallthru
        _
      %p212 = scmp.le.s32.totalorder 1, %s18
      %p213 = scmp.lt.s32.totalorder %s18, 19
      %p214 = pnand %p212, %p213
      %p215 = pneg %p214
      // Predicated region
      $region29: #{tpu_custom_call.1} parent=5 // pred_check
        _
      $region30: #{tpu_custom_call.1} parent=5 // pred_check_branch
        %217 = sbr.rel (%p214) target = $region32
      $region31: #{tpu_custom_call.1} parent=5 // pred_region
        %s218 = ssub.s32 %s18, 1
        %s219 = sand.u32 %s54, 1
        %s220 = scalar_lea.sflag [#allocation3], %s219
        %s221 = sand.u32 %s54, 1
        %s222 = smul.addr %s221, 128
        %s223 = scalar_lea.vmem [#allocation2], %s222
        // Predicated region
        $region33: #{tpu_custom_call.1} parent=31 // pred_check
          %p224 = pneg %p67
        $region34: #{tpu_custom_call.1} parent=31 // pred_check_branch
          %226 = sbr.rel (%p224) target = $region36
        $region35: #{tpu_custom_call.1} parent=31 // pred_region
          %227 = dma.done %s220, 2048
        $region36: #{tpu_custom_call.1} parent=31 // pred_fallthru
          _
        %s228 = sand.u32 %s82, 1
        %s229 = scalar_lea.sflag [#allocation6], %s228
        %s230 = sand.u32 %s82, 1
        %s231 = smul.addr %s230, 16
        %s232 = scalar_lea.vmem [#allocation5], %s231
        // Predicated region
        $region37: #{tpu_custom_call.1} parent=31 // pred_check
          %p233 = pneg %p95
        $region38: #{tpu_custom_call.1} parent=31 // pred_check_branch
          %235 = sbr.rel (%p233) target = $region40
        $region39: #{tpu_custom_call.1} parent=31 // pred_region
          %236 = dma.done %s229, 256
        $region40: #{tpu_custom_call.1} parent=31 // pred_fallthru
          _
        %s237 = sand.u32 %s54, 1
        %s238 = scalar_lea.sflag [#allocation3], %s237
        %s239 = sand.u32 %s54, 1
        %s240 = smul.addr %s239, 128
        %s241 = scalar_lea.vmem [#allocation2], %s240
        %p242 = pneg %p67
        %p243 = pneg %p64
        %s244 = sand.u32 %s82, 1
        %s245 = scalar_lea.sflag [#allocation6], %s244
        %s246 = sand.u32 %s82, 1
        %s247 = smul.addr %s246, 16
        %s248 = scalar_lea.vmem [#allocation5], %s247
        %p249 = pneg %p95
        %p250 = pneg %p92
        %p251 = pneg %p116
        %p252 = pneg %p113
        %p253 = pneg %p142
        %p254 = pneg %p139
        %s255 = sand.u32 %s129, 1
        %s256 = scalar_lea.sflag [#allocation4], %s255
        %s257 = sand.u32 %s129, 1
        %s258 = smul.addr %s257, 16
        %s259 = scalar_lea.vmem [#allocation7], %s258
        %s260 = smul.u32 2, %s30
        %p262 = scmp.eq.s32.totalorder %s29, 0
        %p263 = scmp.eq.s32.totalorder %s30, 0
        %p264 = pnand %p262, %p263
        %p265 = pneg %p264
        // Predicated region
        $region41: #{tpu_custom_call.1} parent=31 // pred_check
          _
        $region42: #{tpu_custom_call.1} parent=31 // pred_check_branch
          %267 = sbr.rel (%p264) target = $region44
        $region43: #{tpu_custom_call.1} parent=31 // pred_region
          %v268 = vld [vmem:[%s2] sm:$0xff]
          %v269 = vld [vmem:[%s2 + $0x8] sm:$0xff]
          %271 = vset.pattern.permute.xlu0 0
          %272 = vperm.xlu0 %271, %v268
          %v273 = vpop.permute.xlu0 %272
          %276 = vset.pattern.permute.xlu0 0
          %277 = vperm.xlu0 %276, %v269
          %v278 = vpop.permute.xlu0 %277
          %280 = vst [vmem:[%s259] sm:$0xff] %v273
          %281 = vst [vmem:[%s259 + $0x8] sm:$0xff] %v278
        $region44: #{tpu_custom_call.1} parent=31 // pred_fallthru
          _
        %v282 = vld [vmem:[%s259] sm:$0xff]
        %v283 = vld [vmem:[%s259 + $0x8] sm:$0xff]
        %v284 = vld [vmem:[%s232] sm:$0xff]
        %v285 = vld [vmem:[%s232 + $0x8] sm:$0xff]
        %v286 = vld [vmem:[%s223] sm:$0xf]
        %v287 = vld [vmem:[%s223 + $0x4] sm:$0xf]
        %v288 = vld [vmem:[%s223 + $0x8] sm:$0xf]
        %v289 = vld [vmem:[%s223 + $0xc] sm:$0xf]
        %v290 = vld [vmem:[%s223 + $0x10] sm:$0xf]
        %v291 = vld [vmem:[%s223 + $0x14] sm:$0xf]
        %v292 = vld [vmem:[%s223 + $0x18] sm:$0xf]
        %v293 = vld [vmem:[%s223 + $0x1c] sm:$0xf]
        %v294 = vld [vmem:[%s223 + $0x20] sm:$0xf]
        %v295 = vld [vmem:[%s223 + $0x24] sm:$0xf]
        %v296 = vld [vmem:[%s223 + $0x28] sm:$0xf]
        %v297 = vld [vmem:[%s223 + $0x2c] sm:$0xf]
        %v298 = vld [vmem:[%s223 + $0x30] sm:$0xf]
        %v299 = vld [vmem:[%s223 + $0x34] sm:$0xf]
        %v300 = vld [vmem:[%s223 + $0x38] sm:$0xf]
        %v301 = vld [vmem:[%s223 + $0x3c] sm:$0xf]
        %v302 = vld [vmem:[%s223 + $0x40] sm:$0xf]
        %v303 = vld [vmem:[%s223 + $0x44] sm:$0xf]
        %v304 = vld [vmem:[%s223 + $0x48] sm:$0xf]
        %v305 = vld [vmem:[%s223 + $0x4c] sm:$0xf]
        %v306 = vld [vmem:[%s223 + $0x50] sm:$0xf]
        %v307 = vld [vmem:[%s223 + $0x54] sm:$0xf]
        %v308 = vld [vmem:[%s223 + $0x58] sm:$0xf]
        %v309 = vld [vmem:[%s223 + $0x5c] sm:$0xf]
        %v310 = vld [vmem:[%s223 + $0x60] sm:$0xf]
        %v311 = vld [vmem:[%s223 + $0x64] sm:$0xf]
        %v312 = vld [vmem:[%s223 + $0x68] sm:$0xf]
        %v313 = vld [vmem:[%s223 + $0x6c] sm:$0xf]
        %v314 = vld [vmem:[%s223 + $0x70] sm:$0xf]
        %v315 = vld [vmem:[%s223 + $0x74] sm:$0xf]
        %v316 = vld [vmem:[%s223 + $0x78] sm:$0xf]
        %v317 = vld [vmem:[%s223 + $0x7c] sm:$0xf]
        %v320 = vunpack.c.l.b16 %v284
        %v321 = vunpack.c.h.b16 %v284
        %v322 = vunpack.c.l.b16 %v285
        %v323 = vunpack.c.h.b16 %v285
        %v324 = vpack.c.b16 %v322, %v320
        %v325 = vpack.c.b16 %v323, %v321
        %v360 = vunpack.c.l.b16 %v286
        %v361 = vunpack.c.l.b16 %v287
        %v362 = vunpack.c.l.b16 %v288
        %v363 = vunpack.c.l.b16 %v289
        %v364 = vunpack.c.l.b16 %v290
        %v365 = vunpack.c.l.b16 %v291
        %v366 = vunpack.c.l.b16 %v292
        %v367 = vunpack.c.l.b16 %v293
        %v368 = vunpack.c.l.b16 %v294
        %v369 = vunpack.c.l.b16 %v295
        %v370 = vunpack.c.l.b16 %v296
        %v371 = vunpack.c.l.b16 %v297
        %v372 = vunpack.c.l.b16 %v298
        %v373 = vunpack.c.l.b16 %v299
        %v374 = vunpack.c.l.b16 %v300
        %v375 = vunpack.c.l.b16 %v301
        %v376 = vunpack.c.l.b16 %v302
        %v377 = vunpack.c.l.b16 %v303
        %v378 = vunpack.c.l.b16 %v304
        %v379 = vunpack.c.l.b16 %v305
        %v380 = vunpack.c.l.b16 %v306
        %v381 = vunpack.c.l.b16 %v307
        %v382 = vunpack.c.l.b16 %v308
        %v383 = vunpack.c.l.b16 %v309
        %v384 = vunpack.c.l.b16 %v310
        %v385 = vunpack.c.l.b16 %v311
        %v386 = vunpack.c.l.b16 %v312
        %v387 = vunpack.c.l.b16 %v313
        %v388 = vunpack.c.l.b16 %v314
        %v389 = vunpack.c.l.b16 %v315
        %v390 = vunpack.c.l.b16 %v316
        %v391 = vunpack.c.l.b16 %v317
        %v392 = vpack.c.b16 %v361, %v360
        %v393 = vpack.c.b16 %v363, %v362
        %v394 = vpack.c.b16 %v365, %v364
        %v395 = vpack.c.b16 %v367, %v366
        %v396 = vpack.c.b16 %v369, %v368
        %v397 = vpack.c.b16 %v371, %v370
        %v398 = vpack.c.b16 %v373, %v372
        %v399 = vpack.c.b16 %v375, %v374
        %v400 = vpack.c.b16 %v377, %v376
        %v401 = vpack.c.b16 %v379, %v378
        %v402 = vpack.c.b16 %v381, %v380
        %v403 = vpack.c.b16 %v383, %v382
        %v404 = vpack.c.b16 %v385, %v384
        %v405 = vpack.c.b16 %v387, %v386
        %v406 = vpack.c.b16 %v389, %v388
        %v407 = vpack.c.b16 %v391, %v390
        %424 = vmatprep.subr.bf16.mxu0 0
        %425 = vmatpush1.bf16.msra.mxu0 %v392
        %426 = vmatprep.subr.bf16.mxu0 0
        %427 = vmatpush1.bf16.msra.mxu0 %v393
        %428 = vmatprep.subr.bf16.mxu0 0
        %429 = vmatpush1.bf16.msra.mxu0 %v394
        %430 = vmatprep.subr.bf16.mxu0 0
        %431 = vmatpush1.bf16.msra.mxu0 %v395
        %432 = vmatprep.subr.bf16.mxu0 0
        %433 = vmatpush1.bf16.msra.mxu0 %v396
        %434 = vmatprep.subr.bf16.mxu0 0
        %435 = vmatpush1.bf16.msra.mxu0 %v397
        %436 = vmatprep.subr.bf16.mxu0 0
        %437 = vmatpush1.bf16.msra.mxu0 %v398
        %438 = vmatprep.subr.bf16.mxu0 0
        %439 = vmatpush1.bf16.msra.mxu0 %v399
        %440 = vmatprep.subr.bf16.mxu0 0
        %441 = vmatpush1.bf16.msra.mxu0 %v400
        %442 = vmatprep.subr.bf16.mxu0 0
        %443 = vmatpush1.bf16.msra.mxu0 %v401
        %444 = vmatprep.subr.bf16.mxu0 0
        %445 = vmatpush1.bf16.msra.mxu0 %v402
        %446 = vmatprep.subr.bf16.mxu0 0
        %447 = vmatpush1.bf16.msra.mxu0 %v403
        %448 = vmatprep.subr.bf16.mxu0 0
        %449 = vmatpush1.bf16.msra.mxu0 %v404
        %450 = vmatprep.subr.bf16.mxu0 0
        %451 = vmatpush1.bf16.msra.mxu0 %v405
        %452 = vmatprep.subr.bf16.mxu0 0
        %453 = vmatpush1.bf16.msra.mxu0 %v406
        %454 = vmatprep.subr.bf16.mxu0 0
        %455 = vmatpush1.bf16.msra.mxu0 %v407
        %456 = vmatprep.mubr.bf16.mxu0 %v325
        %457 = vmatmul.mubr.bf16.gmra.mrb[0].mxu0 %v324
        %v458 = vpop.f32.mrb[0].mxu0
        %v459 = vadd.f32 0.0, %v458
        %v460 = vpop.f32.mrb[0].mxu0
        %v461 = vpop.f32.mrb[0].mxu0
        %v462 = vadd.f32 0.0, %v461
        %v463 = vpop.f32.mrb[0].mxu0
        %464 = vdwg.mxu0
        %v465 = vadd.f32 %v282, %v459
        %v466 = vadd.f32 %v283, %v462
        %467 = vst [vmem:[%s259] sm:$0xff] %v465
        %468 = vst [vmem:[%s259 + $0x8] sm:$0xff] %v466
        %s469 = sand.u32 %s129, 1
        %s470 = scalar_lea.sflag [#allocation4], %s469
        %s471 = sand.u32 %s129, 1
        %s472 = smul.addr %s471, 16
        %s473 = scalar_lea.vmem [#allocation7], %s472
        // Predicated region
        $region45: #{tpu_custom_call.1} parent=31 // pred_check
          %p474 = pneg %p139
        $region46: #{tpu_custom_call.1} parent=31 // pred_check_branch
          %476 = sbr.rel (%p474) target = $region48
        $region47: #{tpu_custom_call.1} parent=31 // pred_region
          %s478 = ssub.s32 256, 256
          %479 = vsyncadd %s470, %s478
          %s480 = smul.addr %s28, 128
          %s481 = scalar_lea.hbm %s3, %s480
          %s482 = sshll.u32 %s473, 4
          %s483 = int_to_ptr.vmem [resolvable:$true] %s482
          %488 = dma.vmem_to_hbm [thread:$0]  %s483, 256, %s481, %s470, 128, 256, 8
        $region48: #{tpu_custom_call.1} parent=31 // pred_fallthru
          _
      $region32: #{tpu_custom_call.1} parent=5 // pred_fallthru
        _
      %p489 = scmp.le.s32.totalorder 2, %s18
      // Predicated region
      $region49: #{tpu_custom_call.1} parent=5 // pred_check
        %p490 = pneg %p489
      $region50: #{tpu_custom_call.1} parent=5 // pred_check_branch
        %492 = sbr.rel (%p490) target = $region52
      $region51: #{tpu_custom_call.1} parent=5 // pred_region
        %s493 = ssub.s32 %s18, 2
        // Predicated region
        $region53: #{tpu_custom_call.1} parent=51 // pred_check
          %p494 = pneg %p145
        $region54: #{tpu_custom_call.1} parent=51 // pred_check_branch
          %496 = sbr.rel (%p494) target = $region56
        $region55: #{tpu_custom_call.1} parent=51 // pred_region
          %s497 = sand.u32 %s130, 1
          %s498 = scalar_lea.sflag [#allocation4], %s497
          %s499 = sand.u32 %s130, 1
          %s500 = smul.addr %s499, 16
          %s501 = scalar_lea.vmem [#allocation7], %s500
          %502 = dma.done %s498, 256
        $region56: #{tpu_custom_call.1} parent=51 // pred_fallthru
          _
      $region52: #{tpu_custom_call.1} parent=5 // pred_fallthru
        _
    $region6: #{tpu_custom_call.1} parent=1 // loop_footer
      %s22 = sadd.s32 1, %s18
    $region7: #{tpu_custom_call.1} parent=1 // loop_footer_branch
      %17 = sbr.rel target = $region3
    $region8: #{tpu_custom_call.1} parent=1 // loop_exit
      _
    %503 = vsyncpa [#allocation3], 1
    %s504 = scalar_lea.sflag [#allocation3], 1
    %505 = vsyncpa %s504, 1
    %506 = vsyncpa [#allocation6], 1
    %s507 = scalar_lea.sflag [#allocation6], 1
    %508 = vsyncpa %s507, 1
    %509 = vsyncpa [#allocation4], 1
    %s510 = scalar_lea.sflag [#allocation4], 1
    %511 = vsyncpa %s510, 1

</llo_original>
